<compile_context>
chip_gen: v7x
topology: tpu7x:2x2x1
jax: 0.10.0
libtpu: 0.0.40
codegen_flags: <defaults>
</compile_context>

<pallas_src>
import functools

import jax
import jax.numpy as jnp
from jax.experimental import pallas as pl
from jax.experimental.pallas import tpu as pltpu

NEG_SLOPE = 0.01  # nn.LeakyReLU() default


def _lrelu(v):
    # max(v, a*v) == LeakyReLU for 0 < a < 1 (cheaper than cmp+mul+select).
    return jnp.maximum(v, NEG_SLOPE * v)


def _round_up(n, m):
    return ((n + m - 1) // m) * m


def _device_kind():
    try:
        return jax.devices()[0].device_kind.lower()
    except Exception:
        return ""


def _num_tensorcores():
    # v7x exposes 2 TensorCores per chip; v5e/v6e have 1.
    return 2 if "v7" in _device_kind() else 1


def _has_bf16_vpu():
    k = _device_kind()
    return ("v6" in k) or ("v7" in k)


def _choose_tiling(B, tb, num_cores):
    """Returns (tb_eff, B_pad, num_tiles)."""
    # Single tile when the whole (16-aligned) batch fits and there is no
    # second TensorCore worth feeding.
    if B <= tb and (num_cores <= 1 or B < 256):
        tb_eff = max(16, _round_up(B, 16))
        return tb_eff, tb_eff, 1
    # Multi-tile: lane-legal (x128) tiles, balanced, and a tile count that is a
    # multiple of num_cores so the "parallel" grid axis keeps every core busy.
    tb_cap = _round_up(max(min(tb, B), 128), 128)
    num_tiles = -(-B // tb_cap)                       # ceil
    num_tiles = _round_up(num_tiles, max(1, num_cores))
    tb_eff = _round_up(-(-B // num_tiles), 128)
    return tb_eff, tb_eff * num_tiles, num_tiles


# ---------------------------------------------------------------------------
# Kernel
# ---------------------------------------------------------------------------
def kcs_kernel(x_ref,
               w1_ref,
               w2_ref, b2_ref,
               w3_ref, b3_ref,
               w4_ref, b4_ref,
               w5_ref, b5_ref,
               out_ref,
               *, elemwise_bf16):
    act = jnp.bfloat16 if elemwise_bf16 else jnp.float32
    x = x_ref[...]                                             # (tb, K) bf16

    # layer 1: bias folded into W1's padding row (ones column in x) -> no VPU add.
    psi = _lrelu(jnp.dot(x, w1_ref[...],
                         preferred_element_type=jnp.float32))  # f32 (kept for residual)

    # layer 2
    acc2 = jnp.dot(psi.astype(jnp.bfloat16), w2_ref[...],
                   preferred_element_type=jnp.float32)
    d1 = _lrelu(acc2.astype(act) + b2_ref[...].astype(act))

    # layer 3 + residual (residual math kept in f32 for numerics)
    acc3 = jnp.dot(d1.astype(jnp.bfloat16), w3_ref[...],
                   preferred_element_type=jnp.float32)
    d2 = acc3 + b3_ref[...] + psi                              # f32

    # layer_last
    acc4 = jnp.dot(d2.astype(jnp.bfloat16), w4_ref[...],
                   preferred_element_type=jnp.float32)
    y = _lrelu(acc4.astype(act) + b4_ref[...].astype(act))

    # layer_pred has N=1: skip the MXU, VPU multiply + lane reduction in f32.
    vec = jnp.sum(y.astype(jnp.float32) * w5_ref[...], axis=-1)   # (tb,)
    out_ref[...] = (vec + b5_ref[0, 0]).reshape(1, -1).astype(out_ref.dtype)


# ---------------------------------------------------------------------------
# One-time parameter preparation (hoisted out of the hot path)
# ---------------------------------------------------------------------------
def prepare_params(params):
    """Pad W1 to K (multiple of 128) with b1 folded into the extra row, cast
    MXU operands to bf16, transpose w5 into a (1, Cm) row, reshape b5."""
    (w1, b1), (w2, b2), (w3, b3), (w4, b4), (w5, b5) = (
        params["l1"], params["l2"], params["l3"], params["last"], params["pred"])
    d_in, C = w1.shape
    K = _round_up(d_in + 1, 128)                 # +1 lane for the bias column
    w1_p = (jnp.zeros((K, C), jnp.float32)
            .at[:d_in, :].set(w1)
            .at[d_in, :].set(b1.reshape(-1)))
    return {
        "w1": w1_p.astype(jnp.bfloat16),             # (K, C)   bias folded in
        "w2": w2.astype(jnp.bfloat16), "b2": b2,     # (C, C), (1, C)
        "w3": w3.astype(jnp.bfloat16), "b3": b3,     # (C, C), (1, C)
        "w4": w4.astype(jnp.bfloat16), "b4": b4,     # (C, Cm), (1, Cm)
        "w5": w5.T.astype(jnp.float32),              # (1, Cm)  VPU-reduce row
        "b5": b5.reshape(1, 1).astype(jnp.float32),  # (1, 1)   SMEM scalar
    }


# ---------------------------------------------------------------------------
# Wrapper
# ---------------------------------------------------------------------------
def kcs_path(x, prep, *, tb=1024, num_cores=None, elemwise_bf16=None):
    """x: (B, 225) f32.  prep: output of prepare_params()."""
    B, d_in = x.shape
    K, C = prep["w1"].shape
    Cm = prep["w4"].shape[1]
    assert d_in + 1 <= K

    if num_cores is None:
        num_cores = _num_tensorcores()
    if elemwise_bf16 is None:
        elemwise_bf16 = _has_bf16_vpu()

    tb_eff, B_pad, num_tiles = _choose_tiling(B, tb, num_cores)

    # One fused pass over x: append bias-ones column, cast to bf16, zero-pad
    # batch -> B_pad and features -> K.
    x_aug = jnp.concatenate([x, jnp.ones((B, 1), x.dtype)], axis=-1).astype(jnp.bfloat16)
    x_bf = jnp.pad(x_aug, ((0, B_pad - B), (0, K - (d_in + 1))))

    def full(shape):
        # Constant index map -> block stays resident across grid steps.
        return pl.BlockSpec(shape, lambda i: (0,) * len(shape))

    out_row = pl.pallas_call(
        functools.partial(kcs_kernel, elemwise_bf16=elemwise_bf16),
        out_shape=jax.ShapeDtypeStruct((1, B_pad), jnp.float32),
        grid_spec=pltpu.PrefetchScalarGridSpec(
            num_scalar_prefetch=0,
            grid=(num_tiles,),
            in_specs=[
                pl.BlockSpec((tb_eff, K), lambda i: (i, 0)),        # x tile (streams)
                full((K, C)),                                       # layer 1 (bias folded)
                full((C, C)),  full((1, C)),                        # layer 2
                full((C, C)),  full((1, C)),                        # layer 3
                full((C, Cm)), full((1, Cm)),                       # layer_last
                full((1, Cm)),                                      # layer_pred row
                pl.BlockSpec(memory_space=pltpu.MemorySpace.SMEM),  # b5 scalar
            ],
            out_specs=pl.BlockSpec((1, tb_eff), lambda i: (0, i)),  # lane-dense row
        ),
        compiler_params=pltpu.CompilerParams(
            dimension_semantics=("parallel",)),
    )(x_bf, prep["w1"], prep["w2"], prep["b2"], prep["w3"], prep["b3"],
      prep["w4"], prep["b4"], prep["w5"], prep["b5"])

    return out_row.reshape(B_pad, 1)[:B]


# ---------------------------------------------------------------------------
# Synthetic init / pure-JAX reference
# ---------------------------------------------------------------------------
def init_params(key, d_in=225, channel=256, channel_mid=128):
    """Deterministic synthetic init (not a checkpoint load)."""
    def linear(k, fan_in, fan_out):
        kw, kb = jax.random.split(k)
        lim = 1.0 / jnp.sqrt(fan_in)
        W = jax.random.uniform(kw, (fan_in, fan_out), jnp.float32, -lim, lim)
        b = jax.random.uniform(kb, (1, fan_out), jnp.float32, -lim, lim)
        return W, b

    k1, k2, k3, k4, k5 = jax.random.split(key, 5)
    return {
        "l1":   linear(k1, d_in, channel),
        "l2":   linear(k2, channel, channel),
        "l3":   linear(k3, channel, channel),
        "last": linear(k4, channel, channel_mid),
        "pred": linear(k5, channel_mid, 1),
    }


def reference(x, params):
    (w1, b1), (w2, b2), (w3, b3), (w4, b4), (w5, b5) = (
        params["l1"], params["l2"], params["l3"], params["last"], params["pred"])
    psi = _lrelu(x @ w1 + b1)
    d1 = _lrelu(psi @ w2 + b2)
    d2 = d1 @ w3 + b3 + psi
    y = _lrelu(d2 @ w4 + b4)
    return y @ w5 + b5


if __name__ == "__main__":
    key = jax.random.PRNGKey(0)
    kx, kp = jax.random.split(key)

    B, D_IN = 64, 225           # KCS feature vector is 15x15 flattened = 225
    CH, CH_MID = 256, 128       # small, lane-aligned channel / channel_mid

    params = init_params(kp, d_in=D_IN, channel=CH, channel_mid=CH_MID)
    prep = prepare_params(params)   # one-time weight prep (outside hot path)

    # single-tile path (B fits one tile)
    x = jax.random.normal(kx, (B, D_IN), jnp.float32)
    out = jax.block_until_ready(kcs_path(x, prep))
    ref = reference(x, params)
    assert out.shape == (B, 1)
    assert jnp.allclose(out, ref, atol=5e-2, rtol=5e-2), (
        f"max abs err = {jnp.max(jnp.abs(out - ref))}")

    # multi-tile + batch-padding path (grid > 1, B not a multiple of the tile)
    B2 = 300
    x2 = jax.random.normal(jax.random.PRNGKey(1), (B2, D_IN), jnp.float32)
    out2 = jax.block_until_ready(kcs_path(x2, prep, tb=128))
    ref2 = reference(x2, params)
    assert out2.shape == (B2, 1)
    assert jnp.allclose(out2, ref2, atol=5e-2, rtol=5e-2), (
        f"max abs err = {jnp.max(jnp.abs(out2 - ref2))}")

    print("KERNEL_OK")
</pallas_src>

<mosaic_0001>
module attributes {stable_mosaic.version = 11 : i64} {
  func.func @kcs_kernel(%arg0: i32, %arg1: memref<64x256xbf16, #tpu.memory_space<vmem>>, %arg2: memref<256x256xbf16, #tpu.memory_space<vmem>>, %arg3: memref<256x256xbf16, #tpu.memory_space<vmem>>, %arg4: memref<1x256xf32, #tpu.memory_space<vmem>>, %arg5: memref<256x256xbf16, #tpu.memory_space<vmem>>, %arg6: memref<1x256xf32, #tpu.memory_space<vmem>>, %arg7: memref<256x128xbf16, #tpu.memory_space<vmem>>, %arg8: memref<1x128xf32, #tpu.memory_space<vmem>>, %arg9: memref<1x128xf32, #tpu.memory_space<vmem>>, %arg10: memref<1x1xf32, #tpu.memory_space<smem>>, %arg11: memref<1x64xf32, #tpu.memory_space<vmem>>) attributes {dimension_semantics = [#tpu.dimension_semantics<parallel>], iteration_bounds = array<i64: 1>, scalar_prefetch = 0 : i64, scratch_operands = 0 : i64, tpu.core_type = #tpu.core_type<tc>, window_params = [{transform_indices = @transform_0, window_bounds = array<i64: 64, 256>}, {pipeline_mode = #tpu.pipeline_mode<synchronous>, transform_indices = @transform_1, window_bounds = array<i64: 256, 256>}, {pipeline_mode = #tpu.pipeline_mode<synchronous>, transform_indices = @transform_2, window_bounds = array<i64: 256, 256>}, {pipeline_mode = #tpu.pipeline_mode<synchronous>, transform_indices = @transform_3, window_bounds = array<i64: 1, 256>}, {pipeline_mode = #tpu.pipeline_mode<synchronous>, transform_indices = @transform_4, window_bounds = array<i64: 256, 256>}, {pipeline_mode = #tpu.pipeline_mode<synchronous>, transform_indices = @transform_5, window_bounds = array<i64: 1, 256>}, {pipeline_mode = #tpu.pipeline_mode<synchronous>, transform_indices = @transform_6, window_bounds = array<i64: 256, 128>}, {pipeline_mode = #tpu.pipeline_mode<synchronous>, transform_indices = @transform_7, window_bounds = array<i64: 1, 128>}, {pipeline_mode = #tpu.pipeline_mode<synchronous>, transform_indices = @transform_8, window_bounds = array<i64: 1, 128>}, {transform_indices = @transform_9, window_bounds = array<i64: 1, 1>}, {transform_indices = @transform_10, window_bounds = array<i64: 1, 64>}]} {
    %c0 = arith.constant 0 : index
    %c0_0 = arith.constant 0 : index
    %0 = vector.load %arg1[%c0, %c0_0] : memref<64x256xbf16, #tpu.memory_space<vmem>>, vector<64x256xbf16>
    %c0_1 = arith.constant 0 : index
    %c0_2 = arith.constant 0 : index
    %1 = vector.load %arg2[%c0_1, %c0_2] : memref<256x256xbf16, #tpu.memory_space<vmem>>, vector<256x256xbf16>
    %cst = arith.constant dense<0.000000e+00> : vector<64x256xf32>
    %2 = tpu.matmul %0, %1, %cst {dimension_numbers = #tpu.dot_dimension_numbers<[1], [0], [0], [1], [0, 0, 1, 1], [], []>} : vector<64x256xbf16>, vector<256x256xbf16>, vector<64x256xf32> -> vector<64x256xf32>
    %cst_3 = arith.constant 0.00999999977 : f32
    %3 = vector.broadcast %cst_3 : f32 to vector<64x256xf32>
    %4 = arith.mulf %3, %2 : vector<64x256xf32>
    %5 = arith.maximumf %2, %4 : vector<64x256xf32>
    %6 = arith.truncf %5 : vector<64x256xf32> to vector<64x256xbf16>
    %c0_4 = arith.constant 0 : index
    %c0_5 = arith.constant 0 : index
    %7 = vector.load %arg3[%c0_4, %c0_5] : memref<256x256xbf16, #tpu.memory_space<vmem>>, vector<256x256xbf16>
    %cst_6 = arith.constant dense<0.000000e+00> : vector<64x256xf32>
    %8 = tpu.matmul %6, %7, %cst_6 {dimension_numbers = #tpu.dot_dimension_numbers<[1], [0], [0], [1], [0, 0, 1, 1], [], []>} : vector<64x256xbf16>, vector<256x256xbf16>, vector<64x256xf32> -> vector<64x256xf32>
    %c0_7 = arith.constant 0 : index
    %c0_8 = arith.constant 0 : index
    %9 = vector.load %arg4[%c0_7, %c0_8] : memref<1x256xf32, #tpu.memory_space<vmem>>, vector<1x256xf32>
    %10 = vector.broadcast %9 : vector<1x256xf32> to vector<64x256xf32>
    %11 = arith.addf %8, %10 : vector<64x256xf32>
    %cst_9 = arith.constant 0.00999999977 : f32
    %12 = vector.broadcast %cst_9 : f32 to vector<64x256xf32>
    %13 = arith.mulf %12, %11 : vector<64x256xf32>
    %14 = arith.maximumf %11, %13 : vector<64x256xf32>
    %15 = arith.truncf %14 : vector<64x256xf32> to vector<64x256xbf16>
    %c0_10 = arith.constant 0 : index
    %c0_11 = arith.constant 0 : index
    %16 = vector.load %arg5[%c0_10, %c0_11] : memref<256x256xbf16, #tpu.memory_space<vmem>>, vector<256x256xbf16>
    %cst_12 = arith.constant dense<0.000000e+00> : vector<64x256xf32>
    %17 = tpu.matmul %15, %16, %cst_12 {dimension_numbers = #tpu.dot_dimension_numbers<[1], [0], [0], [1], [0, 0, 1, 1], [], []>} : vector<64x256xbf16>, vector<256x256xbf16>, vector<64x256xf32> -> vector<64x256xf32>
    %c0_13 = arith.constant 0 : index
    %c0_14 = arith.constant 0 : index
    %18 = vector.load %arg6[%c0_13, %c0_14] : memref<1x256xf32, #tpu.memory_space<vmem>>, vector<1x256xf32>
    %19 = vector.broadcast %18 : vector<1x256xf32> to vector<64x256xf32>
    %20 = arith.addf %17, %19 : vector<64x256xf32>
    %21 = arith.addf %20, %5 : vector<64x256xf32>
    %22 = arith.truncf %21 : vector<64x256xf32> to vector<64x256xbf16>
    %c0_15 = arith.constant 0 : index
    %c0_16 = arith.constant 0 : index
    %23 = vector.load %arg7[%c0_15, %c0_16] : memref<256x128xbf16, #tpu.memory_space<vmem>>, vector<256x128xbf16>
    %cst_17 = arith.constant dense<0.000000e+00> : vector<64x128xf32>
    %24 = tpu.matmul %22, %23, %cst_17 {dimension_numbers = #tpu.dot_dimension_numbers<[1], [0], [0], [1], [0, 0, 1, 1], [], []>} : vector<64x256xbf16>, vector<256x128xbf16>, vector<64x128xf32> -> vector<64x128xf32>
    %c0_18 = arith.constant 0 : index
    %c0_19 = arith.constant 0 : index
    %25 = vector.load %arg8[%c0_18, %c0_19] : memref<1x128xf32, #tpu.memory_space<vmem>>, vector<1x128xf32>
    %26 = vector.broadcast %25 : vector<1x128xf32> to vector<64x128xf32>
    %27 = arith.addf %24, %26 : vector<64x128xf32>
    %cst_20 = arith.constant 0.00999999977 : f32
    %28 = vector.broadcast %cst_20 : f32 to vector<64x128xf32>
    %29 = arith.mulf %28, %27 : vector<64x128xf32>
    %30 = arith.maximumf %27, %29 : vector<64x128xf32>
    %c0_21 = arith.constant 0 : index
    %c0_22 = arith.constant 0 : index
    %31 = vector.load %arg9[%c0_21, %c0_22] : memref<1x128xf32, #tpu.memory_space<vmem>>, vector<1x128xf32>
    %32 = vector.broadcast %31 : vector<1x128xf32> to vector<64x128xf32>
    %33 = arith.mulf %30, %32 : vector<64x128xf32>
    %cst_23 = arith.constant dense<0.000000e+00> : vector<64xf32>
    %34 = vector.multi_reduction <add>, %33, %cst_23 [1] : vector<64x128xf32> to vector<64xf32>
    %c0_24 = arith.constant 0 : index
    %c0_25 = arith.constant 0 : index
    %35 = memref.load %arg10[%c0_24, %c0_25] : memref<1x1xf32, #tpu.memory_space<smem>>
    %36 = vector.broadcast %35 : f32 to vector<64xf32>
    %37 = arith.addf %34, %36 : vector<64xf32>
    %38 = vector.shape_cast %37 : vector<64xf32> to vector<1x64xf32>
    %c0_26 = arith.constant 0 : index
    %c0_27 = arith.constant 0 : index
    %39 = vector.load %arg11[%c0_26, %c0_27] : memref<1x64xf32, #tpu.memory_space<vmem>>, vector<1x64xf32>
    tpu.vector_store %arg11[%c0_26, %c0_27], %38 {strides = array<i32>} : memref<1x64xf32, #tpu.memory_space<vmem>>, vector<1x64xf32>,
    return
  }
  func.func @transform_0(%arg0: i32) -> (i32, i32) {
    %c0_i32 = arith.constant 0 : i32
    %c0_i32_0 = arith.constant 0 : i32
    return %arg0, %c0_i32 : i32, i32
  }
  func.func @transform_1(%arg0: i32) -> (i32, i32) {
    %c0_i32 = arith.constant 0 : i32
    %c0_i32_0 = arith.constant 0 : i32
    %c0_i32_1 = arith.constant 0 : i32
    return %c0_i32, %c0_i32_0 : i32, i32
  }
  func.func @transform_2(%arg0: i32) -> (i32, i32) {
    %c0_i32 = arith.constant 0 : i32
    %c0_i32_0 = arith.constant 0 : i32
    %c0_i32_1 = arith.constant 0 : i32
    return %c0_i32, %c0_i32_0 : i32, i32
  }
  func.func @transform_3(%arg0: i32) -> (i32, i32) {
    %c0_i32 = arith.constant 0 : i32
    %c0_i32_0 = arith.constant 0 : i32
    %c0_i32_1 = arith.constant 0 : i32
    return %c0_i32, %c0_i32_0 : i32, i32
  }
  func.func @transform_4(%arg0: i32) -> (i32, i32) {
    %c0_i32 = arith.constant 0 : i32
    %c0_i32_0 = arith.constant 0 : i32
    %c0_i32_1 = arith.constant 0 : i32
    return %c0_i32, %c0_i32_0 : i32, i32
  }
  func.func @transform_5(%arg0: i32) -> (i32, i32) {
    %c0_i32 = arith.constant 0 : i32
    %c0_i32_0 = arith.constant 0 : i32
    %c0_i32_1 = arith.constant 0 : i32
    return %c0_i32, %c0_i32_0 : i32, i32
  }
  func.func @transform_6(%arg0: i32) -> (i32, i32) {
    %c0_i32 = arith.constant 0 : i32
    %c0_i32_0 = arith.constant 0 : i32
    %c0_i32_1 = arith.constant 0 : i32
    return %c0_i32, %c0_i32_0 : i32, i32
  }
  func.func @transform_7(%arg0: i32) -> (i32, i32) {
    %c0_i32 = arith.constant 0 : i32
    %c0_i32_0 = arith.constant 0 : i32
    %c0_i32_1 = arith.constant 0 : i32
    return %c0_i32, %c0_i32_0 : i32, i32
  }
  func.func @transform_8(%arg0: i32) -> (i32, i32) {
    %c0_i32 = arith.constant 0 : i32
    %c0_i32_0 = arith.constant 0 : i32
    %c0_i32_1 = arith.constant 0 : i32
    return %c0_i32, %c0_i32_0 : i32, i32
  }
  func.func @transform_9(%arg0: i32) -> (i32, i32) {
    %c0_i32 = arith.constant 0 : i32
    %c0_i32_0 = arith.constant 0 : i32
    %c0_i32_1 = arith.constant 0 : i32
    return %c0_i32, %c0_i32_0 : i32, i32
  }
  func.func @transform_10(%arg0: i32) -> (i32, i32) {
    %c0_i32 = arith.constant 0 : i32
    %c0_i32_0 = arith.constant 0 : i32
    return %c0_i32, %arg0 : i32, i32
  }
}

</mosaic_0001>

<llo_original>
// kernel: tpu_custom_call.1
$region0: #{tpu_custom_call.1}
  #allocation0 [shape = 'u32[]', space=smem, size = 0x4, offset = 0x4, fixed_abs, tag = 'smem constant byte address 0x4 - core index']
  #allocation1 [shape = 'u32[144,128]{1,0:T(1,128)}', space=vmem, size = 0x12000, scoped, tag = 'internal scratch']
  #allocation2 [shape = 'f32[1,1]{1,0:T(1,128)S(6)}', space=smem, size = 0x200, scoped, tag = 'scoped memory for tpu_custom_call.1']
  %s0 = inlined_call_operand.hbm [shape: bf16[64,256], index: 0, kind: input, shape index: {}]
  %s1 = inlined_call_operand.hbm [shape: bf16[256,256], index: 1, kind: input, shape index: {}]
  %s2 = inlined_call_operand.hbm [shape: bf16[256,256], index: 2, kind: input, shape index: {}]
  %s3 = inlined_call_operand.vmem [shape: f32[1,256], index: 3, kind: input, shape index: {}]
  %s4 = inlined_call_operand.hbm [shape: bf16[256,256], index: 4, kind: input, shape index: {}]
  %s5 = inlined_call_operand.vmem [shape: f32[1,256], index: 5, kind: input, shape index: {}]
  %s6 = inlined_call_operand.hbm [shape: bf16[256,128], index: 6, kind: input, shape index: {}]
  %s7 = inlined_call_operand.vmem [shape: f32[1,128], index: 7, kind: input, shape index: {}]
  %s8 = inlined_call_operand.vmem [shape: f32[1,128], index: 8, kind: input, shape index: {}]
  %s9 = inlined_call_operand.<no memory space> [shape: f32[1,1], index: 9, kind: input, shape index: {}]
  %s10 = inlined_call_operand.hbm [shape: f32[1,64], index: 10, kind: output, shape index: {}]
  %s11 = sld [smem:[#allocation0]]
  $region70: #{tpu_custom_call.1} parent=0
    _
  %s13 = ssub.s32 1, %s11
  %s14 = scalar_select 0, %s13, %s11
  %15 = sst [smem:[#allocation2]] %s9
  $region1: #{tpu_custom_call.1} parent=0
    #allocation3 [shape = 'u8[32768]{0}', space=vmem, size = 0x8000, scoped, tag = 'input window, operand 0, single buffered']
    #allocation4 [shape = 's32[1]{0}', space=sflag, size = 0x4, scoped, tag = 'scoped memory for tpu_custom_call.1']
    #allocation5 [shape = 's32[1]{0}', space=sflag, size = 0x4, scoped, tag = 'scoped memory for tpu_custom_call.1']
    #allocation6 [shape = 'u8[131072]{0}', space=vmem, size = 0x20000, scoped, tag = 'input window, operand 1, single buffered']
    #allocation7 [shape = 's32[1]{0}', space=sflag, size = 0x4, scoped, tag = 'scoped memory for tpu_custom_call.1']
    #allocation8 [shape = 'u8[131072]{0}', space=vmem, size = 0x20000, scoped, tag = 'input window, operand 2, single buffered']
    #allocation9 [shape = 'u8[131072]{0}', space=vmem, size = 0x20000, scoped, tag = 'input window, operand 4, single buffered']
    #allocation10 [shape = 's32[1]{0}', space=sflag, size = 0x4, scoped, tag = 'scoped memory for tpu_custom_call.1']
    #allocation11 [shape = 'u8[65536]{0}', space=vmem, size = 0x10000, scoped, tag = 'input window, operand 6, single buffered']
    #allocation12 [shape = 'u8[512]{0}', space=vmem, size = 0x400, scoped, tag = 'output window, operand 0, single buffered']
    %16 = vsyncpa [#allocation4], 0
    %17 = vsyncpa [#allocation7], 0
    %18 = vsyncpa [#allocation10], 0
    %19 = vsyncpa [#allocation5], 0
    // Predicated region
    $region2: #{tpu_custom_call.1} parent=1 // pred_check
      _
    $region3: #{tpu_custom_call.1} parent=1 // pred_check_branch
      %21 = sbr.rel (0) target = $region5
    $region4: #{tpu_custom_call.1} parent=1 // pred_region
      %s23 = ssub.s32 1024, 1024
      %24 = vsyncadd [#allocation4], %s23
      %s25 = sshll.u32 [#allocation3], 4
      %s26 = int_to_ptr.vmem [resolvable:$true] %s25
      %31 = dma.hbm_to_vmem [thread:$0]  %s0, 1024, %s26, [#allocation4], 128, 128, 8
    $region5: #{tpu_custom_call.1} parent=1 // pred_fallthru
      _
    // Predicated region
    $region6: #{tpu_custom_call.1} parent=1 // pred_check
      _
    $region7: #{tpu_custom_call.1} parent=1 // pred_check_branch
      %33 = sbr.rel (0) target = $region9
    $region8: #{tpu_custom_call.1} parent=1 // pred_region
      %s35 = ssub.s32 4096, 4096
      %36 = vsyncadd [#allocation7], %s35
      %s37 = sshll.u32 [#allocation6], 4
      %s38 = int_to_ptr.vmem [resolvable:$true] %s37
      %43 = dma.hbm_to_vmem [thread:$0]  %s1, 4096, %s38, [#allocation7], 128, 128, 8
    $region9: #{tpu_custom_call.1} parent=1 // pred_fallthru
      _
    // Predicated region
    $region10: #{tpu_custom_call.1} parent=1 // pred_check
      _
    $region11: #{tpu_custom_call.1} parent=1 // pred_check_branch
      %45 = sbr.rel (0) target = $region13
    $region12: #{tpu_custom_call.1} parent=1 // pred_region
      %s47 = ssub.s32 4096, 4096
      %48 = vsyncadd [#allocation7], %s47
      %s49 = sshll.u32 [#allocation8], 4
      %s50 = int_to_ptr.vmem [resolvable:$true] %s49
      %55 = dma.hbm_to_vmem [thread:$0]  %s2, 4096, %s50, [#allocation7], 128, 128, 8
    $region13: #{tpu_custom_call.1} parent=1 // pred_fallthru
      _
    // Predicated region
    $region14: #{tpu_custom_call.1} parent=1 // pred_check
      _
    $region15: #{tpu_custom_call.1} parent=1 // pred_check_branch
      %57 = sbr.rel (0) target = $region17
    $region16: #{tpu_custom_call.1} parent=1 // pred_region
      _
    $region17: #{tpu_custom_call.1} parent=1 // pred_fallthru
      _
    // Predicated region
    $region18: #{tpu_custom_call.1} parent=1 // pred_check
      _
    $region19: #{tpu_custom_call.1} parent=1 // pred_check_branch
      %59 = sbr.rel (0) target = $region21
    $region20: #{tpu_custom_call.1} parent=1 // pred_region
      %s61 = ssub.s32 4096, 4096
      %62 = vsyncadd [#allocation10], %s61
      %s63 = sshll.u32 [#allocation9], 4
      %s64 = int_to_ptr.vmem [resolvable:$true] %s63
      %69 = dma.hbm_to_vmem [thread:$0]  %s4, 4096, %s64, [#allocation10], 128, 128, 8
    $region21: #{tpu_custom_call.1} parent=1 // pred_fallthru
      _
    // Predicated region
    $region22: #{tpu_custom_call.1} parent=1 // pred_check
      _
    $region23: #{tpu_custom_call.1} parent=1 // pred_check_branch
      %71 = sbr.rel (0) target = $region25
    $region24: #{tpu_custom_call.1} parent=1 // pred_region
      _
    $region25: #{tpu_custom_call.1} parent=1 // pred_fallthru
      _
    // Predicated region
    $region26: #{tpu_custom_call.1} parent=1 // pred_check
      _
    $region27: #{tpu_custom_call.1} parent=1 // pred_check_branch
      %73 = sbr.rel (0) target = $region29
    $region28: #{tpu_custom_call.1} parent=1 // pred_region
      %s75 = ssub.s32 2048, 2048
      %76 = vsyncadd [#allocation10], %s75
      %s77 = sshll.u32 [#allocation11], 4
      %s78 = int_to_ptr.vmem [resolvable:$true] %s77
      %83 = dma.hbm_to_vmem [thread:$0]  %s6, 2048, %s78, [#allocation10], 64, 64, 4
    $region29: #{tpu_custom_call.1} parent=1 // pred_fallthru
      _
    // Predicated region
    $region30: #{tpu_custom_call.1} parent=1 // pred_check
      _
    $region31: #{tpu_custom_call.1} parent=1 // pred_check_branch
      %85 = sbr.rel (0) target = $region33
    $region32: #{tpu_custom_call.1} parent=1 // pred_region
      _
    $region33: #{tpu_custom_call.1} parent=1 // pred_fallthru
      _
    // Predicated region
    $region34: #{tpu_custom_call.1} parent=1 // pred_check
      _
    $region35: #{tpu_custom_call.1} parent=1 // pred_check_branch
      %87 = sbr.rel (0) target = $region37
    $region36: #{tpu_custom_call.1} parent=1 // pred_region
      _
    $region37: #{tpu_custom_call.1} parent=1 // pred_fallthru
      _
    // Predicated region
    $region38: #{tpu_custom_call.1} parent=1 // pred_check
      _
    $region39: #{tpu_custom_call.1} parent=1 // pred_check_branch
      %89 = sbr.rel (0) target = $region41
    $region40: #{tpu_custom_call.1} parent=1 // pred_region
      _
    $region41: #{tpu_custom_call.1} parent=1 // pred_fallthru
      _
    // Predicated region
    $region42: #{tpu_custom_call.1} parent=1 // pred_check
      _
    $region43: #{tpu_custom_call.1} parent=1 // pred_check_branch
      %91 = sbr.rel (0) target = $region45
    $region44: #{tpu_custom_call.1} parent=1 // pred_region
      %92 = dma.done [#allocation4], 1024
    $region45: #{tpu_custom_call.1} parent=1 // pred_fallthru
      _
    // Predicated region
    $region46: #{tpu_custom_call.1} parent=1 // pred_check
      _
    $region47: #{tpu_custom_call.1} parent=1 // pred_check_branch
      %94 = sbr.rel (0) target = $region49
    $region48: #{tpu_custom_call.1} parent=1 // pred_region
      %95 = dma.done [#allocation7], 4096
    $region49: #{tpu_custom_call.1} parent=1 // pred_fallthru
      _
    // Predicated region
    $region50: #{tpu_custom_call.1} parent=1 // pred_check
      _
    $region51: #{tpu_custom_call.1} parent=1 // pred_check_branch
      %97 = sbr.rel (0) target = $region53
    $region52: #{tpu_custom_call.1} parent=1 // pred_region
      %98 = dma.done [#allocation7], 4096
    $region53: #{tpu_custom_call.1} parent=1 // pred_fallthru
      _
    // Predicated region
    $region54: #{tpu_custom_call.1} parent=1 // pred_check
      _
    $region55: #{tpu_custom_call.1} parent=1 // pred_check_branch
      %100 = sbr.rel (0) target = $region57
    $region56: #{tpu_custom_call.1} parent=1 // pred_region
      %101 = dma.done [#allocation10], 4096
    $region57: #{tpu_custom_call.1} parent=1 // pred_fallthru
      _
    // Predicated region
    $region58: #{tpu_custom_call.1} parent=1 // pred_check
      _
    $region59: #{tpu_custom_call.1} parent=1 // pred_check_branch
      %103 = sbr.rel (0) target = $region61
    $region60: #{tpu_custom_call.1} parent=1 // pred_region
      %104 = dma.done [#allocation10], 2048
    $region61: #{tpu_custom_call.1} parent=1 // pred_fallthru
      _
    %v106 = vld [vmem:[#allocation3] sm:$0xff]
    %v107 = vld [vmem:[#allocation3 + $0x8] sm:$0xff]
    %v108 = vld [vmem:[#allocation3 + $0x10] sm:$0xff]
    %v109 = vld [vmem:[#allocation3 + $0x18] sm:$0xff]
    %v110 = vld [vmem:[#allocation3 + $0x20] sm:$0xff]
    %v111 = vld [vmem:[#allocation3 + $0x28] sm:$0xff]
    %v112 = vld [vmem:[#allocation3 + $0x30] sm:$0xff]
    %v113 = vld [vmem:[#allocation3 + $0x38] sm:$0xff]
    %v114 = vld [vmem:[#allocation6] sm:$0xff]
    %v115 = vld [vmem:[#allocation6 + $0x8] sm:$0xff]
    %v116 = vld [vmem:[#allocation6 + $0x10] sm:$0xff]
    %v117 = vld [vmem:[#allocation6 + $0x18] sm:$0xff]
    %v118 = vld [vmem:[#allocation6 + $0x20] sm:$0xff]
    %v119 = vld [vmem:[#allocation6 + $0x28] sm:$0xff]
    %v120 = vld [vmem:[#allocation6 + $0x30] sm:$0xff]
    %v121 = vld [vmem:[#allocation6 + $0x38] sm:$0xff]
    %v122 = vld [vmem:[#allocation6 + $0x40] sm:$0xff]
    %v123 = vld [vmem:[#allocation6 + $0x48] sm:$0xff]
    %v124 = vld [vmem:[#allocation6 + $0x50] sm:$0xff]
    %v125 = vld [vmem:[#allocation6 + $0x58] sm:$0xff]
    %v126 = vld [vmem:[#allocation6 + $0x60] sm:$0xff]
    %v127 = vld [vmem:[#allocation6 + $0x68] sm:$0xff]
    %v128 = vld [vmem:[#allocation6 + $0x70] sm:$0xff]
    %v129 = vld [vmem:[#allocation6 + $0x78] sm:$0xff]
    %v130 = vld [vmem:[#allocation6 + $0x80] sm:$0xff]
    %v131 = vld [vmem:[#allocation6 + $0x88] sm:$0xff]
    %v132 = vld [vmem:[#allocation6 + $0x90] sm:$0xff]
    %v133 = vld [vmem:[#allocation6 + $0x98] sm:$0xff]
    %v134 = vld [vmem:[#allocation6 + $0xa0] sm:$0xff]
    %v135 = vld [vmem:[#allocation6 + $0xa8] sm:$0xff]
    %v136 = vld [vmem:[#allocation6 + $0xb0] sm:$0xff]
    %v137 = vld [vmem:[#allocation6 + $0xb8] sm:$0xff]
    %v138 = vld [vmem:[#allocation6 + $0xc0] sm:$0xff]
    %v139 = vld [vmem:[#allocation6 + $0xc8] sm:$0xff]
    %v140 = vld [vmem:[#allocation6 + $0xd0] sm:$0xff]
    %v141 = vld [vmem:[#allocation6 + $0xd8] sm:$0xff]
    %v142 = vld [vmem:[#allocation6 + $0xe0] sm:$0xff]
    %v143 = vld [vmem:[#allocation6 + $0xe8] sm:$0xff]
    %v144 = vld [vmem:[#allocation6 + $0xf0] sm:$0xff]
    %v145 = vld [vmem:[#allocation6 + $0xf8] sm:$0xff]
    %v154 = vunpack.c.l.b16 %v106
    %v155 = vunpack.c.h.b16 %v106
    %v156 = vunpack.c.l.b16 %v107
    %v157 = vunpack.c.h.b16 %v107
    %v158 = vunpack.c.l.b16 %v108
    %v159 = vunpack.c.h.b16 %v108
    %v160 = vunpack.c.l.b16 %v109
    %v161 = vunpack.c.h.b16 %v109
    %v162 = vunpack.c.l.b16 %v110
    %v163 = vunpack.c.h.b16 %v110
    %v164 = vunpack.c.l.b16 %v111
    %v165 = vunpack.c.h.b16 %v111
    %v166 = vunpack.c.l.b16 %v112
    %v167 = vunpack.c.h.b16 %v112
    %v168 = vunpack.c.l.b16 %v113
    %v169 = vunpack.c.h.b16 %v113
    %v170 = vpack.c.b16 %v156, %v154
    %v171 = vpack.c.b16 %v157, %v155
    %v172 = vpack.c.b16 %v160, %v158
    %v173 = vpack.c.b16 %v161, %v159
    %v174 = vpack.c.b16 %v164, %v162
    %v175 = vpack.c.b16 %v165, %v163
    %v176 = vpack.c.b16 %v168, %v166
    %v177 = vpack.c.b16 %v169, %v167
    %v218 = vunpack.c.l.b16 %v114
    %v219 = vunpack.c.h.b16 %v114
    %v220 = vunpack.c.l.b16 %v115
    %v221 = vunpack.c.h.b16 %v115
    %v222 = vunpack.c.l.b16 %v116
    %v223 = vunpack.c.h.b16 %v116
    %v224 = vunpack.c.l.b16 %v117
    %v225 = vunpack.c.h.b16 %v117
    %v226 = vunpack.c.l.b16 %v118
    %v227 = vunpack.c.h.b16 %v118
    %v228 = vunpack.c.l.b16 %v119
    %v229 = vunpack.c.h.b16 %v119
    %v230 = vunpack.c.l.b16 %v120
    %v231 = vunpack.c.h.b16 %v120
    %v232 = vunpack.c.l.b16 %v121
    %v233 = vunpack.c.h.b16 %v121
    %v234 = vunpack.c.l.b16 %v122
    %v235 = vunpack.c.h.b16 %v122
    %v236 = vunpack.c.l.b16 %v123
    %v237 = vunpack.c.h.b16 %v123
    %v238 = vunpack.c.l.b16 %v124
    %v239 = vunpack.c.h.b16 %v124
    %v240 = vunpack.c.l.b16 %v125
    %v241 = vunpack.c.h.b16 %v125
    %v242 = vunpack.c.l.b16 %v126
    %v243 = vunpack.c.h.b16 %v126
    %v244 = vunpack.c.l.b16 %v127
    %v245 = vunpack.c.h.b16 %v127
    %v246 = vunpack.c.l.b16 %v128
    %v247 = vunpack.c.h.b16 %v128
    %v248 = vunpack.c.l.b16 %v129
    %v249 = vunpack.c.h.b16 %v129
    %v250 = vunpack.c.l.b16 %v130
    %v251 = vunpack.c.h.b16 %v130
    %v252 = vunpack.c.l.b16 %v131
    %v253 = vunpack.c.h.b16 %v131
    %v254 = vunpack.c.l.b16 %v132
    %v255 = vunpack.c.h.b16 %v132
    %v256 = vunpack.c.l.b16 %v133
    %v257 = vunpack.c.h.b16 %v133
    %v258 = vunpack.c.l.b16 %v134
    %v259 = vunpack.c.h.b16 %v134
    %v260 = vunpack.c.l.b16 %v135
    %v261 = vunpack.c.h.b16 %v135
    %v262 = vunpack.c.l.b16 %v136
    %v263 = vunpack.c.h.b16 %v136
    %v264 = vunpack.c.l.b16 %v137
    %v265 = vunpack.c.h.b16 %v137
    %v266 = vunpack.c.l.b16 %v138
    %v267 = vunpack.c.h.b16 %v138
    %v268 = vunpack.c.l.b16 %v139
    %v269 = vunpack.c.h.b16 %v139
    %v270 = vunpack.c.l.b16 %v140
    %v271 = vunpack.c.h.b16 %v140
    %v272 = vunpack.c.l.b16 %v141
    %v273 = vunpack.c.h.b16 %v141
    %v274 = vunpack.c.l.b16 %v142
    %v275 = vunpack.c.h.b16 %v142
    %v276 = vunpack.c.l.b16 %v143
    %v277 = vunpack.c.h.b16 %v143
    %v278 = vunpack.c.l.b16 %v144
    %v279 = vunpack.c.h.b16 %v144
    %v280 = vunpack.c.l.b16 %v145
    %v281 = vunpack.c.h.b16 %v145
    %v282 = vpack.c.b16 %v220, %v218
    %v283 = vpack.c.b16 %v221, %v219
    %v284 = vpack.c.b16 %v224, %v222
    %v285 = vpack.c.b16 %v225, %v223
    %v286 = vpack.c.b16 %v228, %v226
    %v287 = vpack.c.b16 %v229, %v227
    %v288 = vpack.c.b16 %v232, %v230
    %v289 = vpack.c.b16 %v233, %v231
    %v290 = vpack.c.b16 %v236, %v234
    %v291 = vpack.c.b16 %v237, %v235
    %v292 = vpack.c.b16 %v240, %v238
    %v293 = vpack.c.b16 %v241, %v239
    %v294 = vpack.c.b16 %v244, %v242
    %v295 = vpack.c.b16 %v245, %v243
    %v296 = vpack.c.b16 %v248, %v246
    %v297 = vpack.c.b16 %v249, %v247
    %v298 = vpack.c.b16 %v252, %v250
    %v299 = vpack.c.b16 %v253, %v251
    %v300 = vpack.c.b16 %v256, %v254
    %v301 = vpack.c.b16 %v257, %v255
    %v302 = vpack.c.b16 %v260, %v258
    %v303 = vpack.c.b16 %v261, %v259
    %v304 = vpack.c.b16 %v264, %v262
    %v305 = vpack.c.b16 %v265, %v263
    %v306 = vpack.c.b16 %v268, %v266
    %v307 = vpack.c.b16 %v269, %v267
    %v308 = vpack.c.b16 %v272, %v270
    %v309 = vpack.c.b16 %v273, %v271
    %v310 = vpack.c.b16 %v276, %v274
    %v311 = vpack.c.b16 %v277, %v275
    %v312 = vpack.c.b16 %v280, %v278
    %v313 = vpack.c.b16 %v281, %v279
    %346 = vmatprep.subr.bf16.mxu0 %v283
    %347 = vmatpush1.bf16.msra.mxu0 %v282
    %348 = vmatprep.subr.bf16.mxu0 %v285
    %349 = vmatpush1.bf16.msra.mxu0 %v284
    %350 = vmatprep.subr.bf16.mxu0 %v287
    %351 = vmatpush1.bf16.msra.mxu0 %v286
    %352 = vmatprep.subr.bf16.mxu0 %v289
    %353 = vmatpush1.bf16.msra.mxu0 %v288
    %354 = vmatprep.subr.bf16.mxu0 %v291
    %355 = vmatpush1.bf16.msra.mxu0 %v290
    %356 = vmatprep.subr.bf16.mxu0 %v293
    %357 = vmatpush1.bf16.msra.mxu0 %v292
    %358 = vmatprep.subr.bf16.mxu0 %v295
    %359 = vmatpush1.bf16.msra.mxu0 %v294
    %360 = vmatprep.subr.bf16.mxu0 %v297
    %361 = vmatpush1.bf16.msra.mxu0 %v296
    %362 = vmatprep.subr.bf16.mxu0 %v299
    %363 = vmatpush1.bf16.msra.mxu0 %v298
    %364 = vmatprep.subr.bf16.mxu0 %v301
    %365 = vmatpush1.bf16.msra.mxu0 %v300
    %366 = vmatprep.subr.bf16.mxu0 %v303
    %367 = vmatpush1.bf16.msra.mxu0 %v302
    %368 = vmatprep.subr.bf16.mxu0 %v305
    %369 = vmatpush1.bf16.msra.mxu0 %v304
    %370 = vmatprep.subr.bf16.mxu0 %v307
    %371 = vmatpush1.bf16.msra.mxu0 %v306
    %372 = vmatprep.subr.bf16.mxu0 %v309
    %373 = vmatpush1.bf16.msra.mxu0 %v308
    %374 = vmatprep.subr.bf16.mxu0 %v311
    %375 = vmatpush1.bf16.msra.mxu0 %v310
    %376 = vmatprep.subr.bf16.mxu0 %v313
    %377 = vmatpush1.bf16.msra.mxu0 %v312
    %378 = vmatprep.mubr.bf16.mxu0 %v171
    %379 = vmatmul.mubr.bf16.gmra.mrb[0].mxu0 %v170
    %v380 = vpop.f32.mrb[0].mxu0
    %v381 = vadd.f32 0.0, %v380
    %v382 = vpop.f32.mrb[0].mxu0
    %v383 = vadd.f32 0.0, %v382
    %v384 = vpop.f32.mrb[0].mxu0
    %v385 = vadd.f32 0.0, %v384
    %v386 = vpop.f32.mrb[0].mxu0
    %v387 = vadd.f32 0.0, %v386
    %388 = vmatprep.mubr.bf16.mxu0 %v173
    %389 = vmatmul.mubr.bf16.gmra.mrb[0].mxu0 %v172
    %v390 = vpop.f32.mrb[0].mxu0
    %v391 = vadd.f32 0.0, %v390
    %v392 = vpop.f32.mrb[0].mxu0
    %v393 = vadd.f32 0.0, %v392
    %v394 = vpop.f32.mrb[0].mxu0
    %v395 = vadd.f32 0.0, %v394
    %v396 = vpop.f32.mrb[0].mxu0
    %v397 = vadd.f32 0.0, %v396
    %398 = vmatprep.mubr.bf16.mxu0 %v175
    %399 = vmatmul.mubr.bf16.gmra.mrb[0].mxu0 %v174
    %v400 = vpop.f32.mrb[0].mxu0
    %v401 = vadd.f32 0.0, %v400
    %v402 = vpop.f32.mrb[0].mxu0
    %v403 = vadd.f32 0.0, %v402
    %v404 = vpop.f32.mrb[0].mxu0
    %v405 = vadd.f32 0.0, %v404
    %v406 = vpop.f32.mrb[0].mxu0
    %v407 = vadd.f32 0.0, %v406
    %408 = vmatprep.mubr.bf16.mxu0 %v177
    %409 = vmatmul.mubr.bf16.gmra.mrb[0].mxu0 %v176
    %v410 = vpop.f32.mrb[0].mxu0
    %v411 = vadd.f32 0.0, %v410
    %v412 = vpop.f32.mrb[0].mxu0
    %v413 = vadd.f32 0.0, %v412
    %v414 = vpop.f32.mrb[0].mxu0
    %v415 = vadd.f32 0.0, %v414
    %v416 = vpop.f32.mrb[0].mxu0
    %v417 = vadd.f32 0.0, %v416
    %418 = vdwg.mxu0
    %v419 = vmul.f32 %v381, 0.01
    %v420 = vmul.f32 %v383, 0.01
    %v421 = vmul.f32 %v385, 0.01
    %v422 = vmul.f32 %v387, 0.01
    %v423 = vmul.f32 %v391, 0.01
    %v424 = vmul.f32 %v393, 0.01
    %v425 = vmul.f32 %v395, 0.01
    %v426 = vmul.f32 %v397, 0.01
    %v427 = vmul.f32 %v401, 0.01
    %v428 = vmul.f32 %v403, 0.01
    %v429 = vmul.f32 %v405, 0.01
    %v430 = vmul.f32 %v407, 0.01
    %v431 = vmul.f32 %v411, 0.01
    %v432 = vmul.f32 %v413, 0.01
    %v433 = vmul.f32 %v415, 0.01
    %v434 = vmul.f32 %v417, 0.01
    %v435 = vmax.f32 %v381, %v419
    %v436 = vmax.f32 %v383, %v420
    %v437 = vmax.f32 %v385, %v421
    %v438 = vmax.f32 %v387, %v422
    %v439 = vmax.f32 %v391, %v423
    %v440 = vmax.f32 %v393, %v424
    %v441 = vmax.f32 %v395, %v425
    %v442 = vmax.f32 %v397, %v426
    %v443 = vmax.f32 %v401, %v427
    %v444 = vmax.f32 %v403, %v428
    %v445 = vmax.f32 %v405, %v429
    %v446 = vmax.f32 %v407, %v430
    %v447 = vmax.f32 %v411, %v431
    %v448 = vmax.f32 %v413, %v432
    %v449 = vmax.f32 %v415, %v433
    %v450 = vmax.f32 %v417, %v434
    %v451 = vpack.c.bf16 %v437, %v435
    %v452 = vpack.c.bf16 %v438, %v436
    %v453 = vpack.c.bf16 %v441, %v439
    %v454 = vpack.c.bf16 %v442, %v440
    %v455 = vpack.c.bf16 %v445, %v443
    %v456 = vpack.c.bf16 %v446, %v444
    %v457 = vpack.c.bf16 %v449, %v447
    %v458 = vpack.c.bf16 %v450, %v448
    %v459 = vld [vmem:[#allocation8] sm:$0xff]
    %v460 = vld [vmem:[#allocation8 + $0x8] sm:$0xff]
    %v461 = vld [vmem:[#allocation8 + $0x10] sm:$0xff]
    %v462 = vld [vmem:[#allocation8 + $0x18] sm:$0xff]
    %v463 = vld [vmem:[#allocation8 + $0x20] sm:$0xff]
    %v464 = vld [vmem:[#allocation8 + $0x28] sm:$0xff]
    %v465 = vld [vmem:[#allocation8 + $0x30] sm:$0xff]
    %v466 = vld [vmem:[#allocation8 + $0x38] sm:$0xff]
    %v467 = vld [vmem:[#allocation8 + $0x40] sm:$0xff]
    %v468 = vld [vmem:[#allocation8 + $0x48] sm:$0xff]
    %v469 = vld [vmem:[#allocation8 + $0x50] sm:$0xff]
    %v470 = vld [vmem:[#allocation8 + $0x58] sm:$0xff]
    %v471 = vld [vmem:[#allocation8 + $0x60] sm:$0xff]
    %v472 = vld [vmem:[#allocation8 + $0x68] sm:$0xff]
    %v473 = vld [vmem:[#allocation8 + $0x70] sm:$0xff]
    %v474 = vld [vmem:[#allocation8 + $0x78] sm:$0xff]
    %v475 = vld [vmem:[#allocation8 + $0x80] sm:$0xff]
    %v476 = vld [vmem:[#allocation8 + $0x88] sm:$0xff]
    %v477 = vld [vmem:[#allocation8 + $0x90] sm:$0xff]
    %v478 = vld [vmem:[#allocation8 + $0x98] sm:$0xff]
    %v479 = vld [vmem:[#allocation8 + $0xa0] sm:$0xff]
    %v480 = vld [vmem:[#allocation8 + $0xa8] sm:$0xff]
    %v481 = vld [vmem:[#allocation8 + $0xb0] sm:$0xff]
    %v482 = vld [vmem:[#allocation8 + $0xb8] sm:$0xff]
    %v483 = vld [vmem:[#allocation8 + $0xc0] sm:$0xff]
    %v484 = vld [vmem:[#allocation8 + $0xc8] sm:$0xff]
    %v485 = vld [vmem:[#allocation8 + $0xd0] sm:$0xff]
    %v486 = vld [vmem:[#allocation8 + $0xd8] sm:$0xff]
    %v487 = vld [vmem:[#allocation8 + $0xe0] sm:$0xff]
    %v488 = vld [vmem:[#allocation8 + $0xe8] sm:$0xff]
    %v489 = vld [vmem:[#allocation8 + $0xf0] sm:$0xff]
    %v490 = vld [vmem:[#allocation8 + $0xf8] sm:$0xff]
    %v491 = vld [vmem:[%s3] sm:$0x3]
    %v493 = vlaneseq
    %v494 = vshrl.u32 %v493, 7
    %v495 = vsub.s32 0, %v494
    %v496 = vrot.slane %v491, %v495
    %v497 = vlaneseq
    %v498 = vshrl.u32 %v497, 7
    %v499 = vsub.s32 1, %v498
    %v500 = vrot.slane %v491, %v499
    %v535 = vunpack.c.l.b16 %v459
    %v536 = vunpack.c.h.b16 %v459
    %v537 = vunpack.c.l.b16 %v460
    %v538 = vunpack.c.h.b16 %v460
    %v539 = vunpack.c.l.b16 %v461
    %v540 = vunpack.c.h.b16 %v461
    %v541 = vunpack.c.l.b16 %v462
    %v542 = vunpack.c.h.b16 %v462
    %v543 = vunpack.c.l.b16 %v463
    %v544 = vunpack.c.h.b16 %v463
    %v545 = vunpack.c.l.b16 %v464
    %v546 = vunpack.c.h.b16 %v464
    %v547 = vunpack.c.l.b16 %v465
    %v548 = vunpack.c.h.b16 %v465
    %v549 = vunpack.c.l.b16 %v466
    %v550 = vunpack.c.h.b16 %v466
    %v551 = vunpack.c.l.b16 %v467
    %v552 = vunpack.c.h.b16 %v467
    %v553 = vunpack.c.l.b16 %v468
    %v554 = vunpack.c.h.b16 %v468
    %v555 = vunpack.c.l.b16 %v469
    %v556 = vunpack.c.h.b16 %v469
    %v557 = vunpack.c.l.b16 %v470
    %v558 = vunpack.c.h.b16 %v470
    %v559 = vunpack.c.l.b16 %v471
    %v560 = vunpack.c.h.b16 %v471
    %v561 = vunpack.c.l.b16 %v472
    %v562 = vunpack.c.h.b16 %v472
    %v563 = vunpack.c.l.b16 %v473
    %v564 = vunpack.c.h.b16 %v473
    %v565 = vunpack.c.l.b16 %v474
    %v566 = vunpack.c.h.b16 %v474
    %v567 = vunpack.c.l.b16 %v475
    %v568 = vunpack.c.h.b16 %v475
    %v569 = vunpack.c.l.b16 %v476
    %v570 = vunpack.c.h.b16 %v476
    %v571 = vunpack.c.l.b16 %v477
    %v572 = vunpack.c.h.b16 %v477
    %v573 = vunpack.c.l.b16 %v478
    %v574 = vunpack.c.h.b16 %v478
    %v575 = vunpack.c.l.b16 %v479
    %v576 = vunpack.c.h.b16 %v479
    %v577 = vunpack.c.l.b16 %v480
    %v578 = vunpack.c.h.b16 %v480
    %v579 = vunpack.c.l.b16 %v481
    %v580 = vunpack.c.h.b16 %v481
    %v581 = vunpack.c.l.b16 %v482
    %v582 = vunpack.c.h.b16 %v482
    %v583 = vunpack.c.l.b16 %v483
    %v584 = vunpack.c.h.b16 %v483
    %v585 = vunpack.c.l.b16 %v484
    %v586 = vunpack.c.h.b16 %v484
    %v587 = vunpack.c.l.b16 %v485
    %v588 = vunpack.c.h.b16 %v485
    %v589 = vunpack.c.l.b16 %v486
    %v590 = vunpack.c.h.b16 %v486
    %v591 = vunpack.c.l.b16 %v487
    %v592 = vunpack.c.h.b16 %v487
    %v593 = vunpack.c.l.b16 %v488
    %v594 = vunpack.c.h.b16 %v488
    %v595 = vunpack.c.l.b16 %v489
    %v596 = vunpack.c.h.b16 %v489
    %v597 = vunpack.c.l.b16 %v490
    %v598 = vunpack.c.h.b16 %v490
    %v599 = vpack.c.b16 %v537, %v535
    %v600 = vpack.c.b16 %v538, %v536
    %v601 = vpack.c.b16 %v541, %v539
    %v602 = vpack.c.b16 %v542, %v540
    %v603 = vpack.c.b16 %v545, %v543
    %v604 = vpack.c.b16 %v546, %v544
    %v605 = vpack.c.b16 %v549, %v547
    %v606 = vpack.c.b16 %v550, %v548
    %v607 = vpack.c.b16 %v553, %v551
    %v608 = vpack.c.b16 %v554, %v552
    %v609 = vpack.c.b16 %v557, %v555
    %v610 = vpack.c.b16 %v558, %v556
    %v611 = vpack.c.b16 %v561, %v559
    %v612 = vpack.c.b16 %v562, %v560
    %v613 = vpack.c.b16 %v565, %v563
    %v614 = vpack.c.b16 %v566, %v564
    %v615 = vpack.c.b16 %v569, %v567
    %v616 = vpack.c.b16 %v570, %v568
    %v617 = vpack.c.b16 %v573, %v571
    %v618 = vpack.c.b16 %v574, %v572
    %v619 = vpack.c.b16 %v577, %v575
    %v620 = vpack.c.b16 %v578, %v576
    %v621 = vpack.c.b16 %v581, %v579
    %v622 = vpack.c.b16 %v582, %v580
    %v623 = vpack.c.b16 %v585, %v583
    %v624 = vpack.c.b16 %v586, %v584
    %v625 = vpack.c.b16 %v589, %v587
    %v626 = vpack.c.b16 %v590, %v588
    %v627 = vpack.c.b16 %v593, %v591
    %v628 = vpack.c.b16 %v594, %v592
    %v629 = vpack.c.b16 %v597, %v595
    %v630 = vpack.c.b16 %v598, %v596
    %663 = vmatprep.subr.bf16.mxu0 %v600
    %664 = vmatpush1.bf16.msra.mxu0 %v599
    %665 = vmatprep.subr.bf16.mxu0 %v602
    %666 = vmatpush1.bf16.msra.mxu0 %v601
    %667 = vmatprep.subr.bf16.mxu0 %v604
    %668 = vmatpush1.bf16.msra.mxu0 %v603
    %669 = vmatprep.subr.bf16.mxu0 %v606
    %670 = vmatpush1.bf16.msra.mxu0 %v605
    %671 = vmatprep.subr.bf16.mxu0 %v608
    %672 = vmatpush1.bf16.msra.mxu0 %v607
    %673 = vmatprep.subr.bf16.mxu0 %v610
    %674 = vmatpush1.bf16.msra.mxu0 %v609
    %675 = vmatprep.subr.bf16.mxu0 %v612
    %676 = vmatpush1.bf16.msra.mxu0 %v611
    %677 = vmatprep.subr.bf16.mxu0 %v614
    %678 = vmatpush1.bf16.msra.mxu0 %v613
    %679 = vmatprep.subr.bf16.mxu0 %v616
    %680 = vmatpush1.bf16.msra.mxu0 %v615
    %681 = vmatprep.subr.bf16.mxu0 %v618
    %682 = vmatpush1.bf16.msra.mxu0 %v617
    %683 = vmatprep.subr.bf16.mxu0 %v620
    %684 = vmatpush1.bf16.msra.mxu0 %v619
    %685 = vmatprep.subr.bf16.mxu0 %v622
    %686 = vmatpush1.bf16.msra.mxu0 %v621
    %687 = vmatprep.subr.bf16.mxu0 %v624
    %688 = vmatpush1.bf16.msra.mxu0 %v623
    %689 = vmatprep.subr.bf16.mxu0 %v626
    %690 = vmatpush1.bf16.msra.mxu0 %v625
    %691 = vmatprep.subr.bf16.mxu0 %v628
    %692 = vmatpush1.bf16.msra.mxu0 %v627
    %693 = vmatprep.subr.bf16.mxu0 %v630
    %694 = vmatpush1.bf16.msra.mxu0 %v629
    %695 = vmatprep.mubr.bf16.mxu0 %v452
    %696 = vmatmul.mubr.bf16.gmra.mrb[0].mxu0 %v451
    %v697 = vpop.f32.mrb[0].mxu0
    %v698 = vadd.f32 %v496, %v697
    %v699 = vpop.f32.mrb[0].mxu0
    %v700 = vadd.f32 %v500, %v699
    %v701 = vpop.f32.mrb[0].mxu0
    %v702 = vadd.f32 %v496, %v701
    %v703 = vpop.f32.mrb[0].mxu0
    %v704 = vadd.f32 %v500, %v703
    %705 = vmatprep.mubr.bf16.mxu0 %v454
    %706 = vmatmul.mubr.bf16.gmra.mrb[0].mxu0 %v453
    %v707 = vpop.f32.mrb[0].mxu0
    %v708 = vadd.f32 %v496, %v707
    %v709 = vpop.f32.mrb[0].mxu0
    %v710 = vadd.f32 %v500, %v709
    %v711 = vpop.f32.mrb[0].mxu0
    %v712 = vadd.f32 %v496, %v711
    %v713 = vpop.f32.mrb[0].mxu0
    %v714 = vadd.f32 %v500, %v713
    %715 = vmatprep.mubr.bf16.mxu0 %v456
    %716 = vmatmul.mubr.bf16.gmra.mrb[0].mxu0 %v455
    %v717 = vpop.f32.mrb[0].mxu0
    %v718 = vadd.f32 %v496, %v717
    %v719 = vpop.f32.mrb[0].mxu0
    %v720 = vadd.f32 %v500, %v719
    %v721 = vpop.f32.mrb[0].mxu0
    %v722 = vadd.f32 %v496, %v721
    %v723 = vpop.f32.mrb[0].mxu0
    %v724 = vadd.f32 %v500, %v723
    %725 = vmatprep.mubr.bf16.mxu0 %v458
    %726 = vmatmul.mubr.bf16.gmra.mrb[0].mxu0 %v457
    %v727 = vpop.f32.mrb[0].mxu0
    %v728 = vadd.f32 %v496, %v727
    %v729 = vpop.f32.mrb[0].mxu0
    %v730 = vadd.f32 %v500, %v729
    %v731 = vpop.f32.mrb[0].mxu0
    %v732 = vadd.f32 %v496, %v731
    %v733 = vpop.f32.mrb[0].mxu0
    %v734 = vadd.f32 %v500, %v733
    %735 = vdwg.mxu0
    %v736 = vmul.f32 %v698, 0.01
    %v737 = vmul.f32 %v700, 0.01
    %v738 = vmul.f32 %v702, 0.01
    %v739 = vmul.f32 %v704, 0.01
    %v740 = vmul.f32 %v708, 0.01
    %v741 = vmul.f32 %v710, 0.01
    %v742 = vmul.f32 %v712, 0.01
    %v743 = vmul.f32 %v714, 0.01
    %v744 = vmul.f32 %v718, 0.01
    %v745 = vmul.f32 %v720, 0.01
    %v746 = vmul.f32 %v722, 0.01
    %v747 = vmul.f32 %v724, 0.01
    %v748 = vmul.f32 %v728, 0.01
    %v749 = vmul.f32 %v730, 0.01
    %v750 = vmul.f32 %v732, 0.01
    %v751 = vmul.f32 %v734, 0.01
    %v752 = vmax.f32 %v698, %v736
    %v753 = vmax.f32 %v700, %v737
    %v754 = vmax.f32 %v702, %v738
    %v755 = vmax.f32 %v704, %v739
    %v756 = vmax.f32 %v708, %v740
    %v757 = vmax.f32 %v710, %v741
    %v758 = vmax.f32 %v712, %v742
    %v759 = vmax.f32 %v714, %v743
    %v760 = vmax.f32 %v718, %v744
    %v761 = vmax.f32 %v720, %v745
    %v762 = vmax.f32 %v722, %v746
    %v763 = vmax.f32 %v724, %v747
    %v764 = vmax.f32 %v728, %v748
    %v765 = vmax.f32 %v730, %v749
    %v766 = vmax.f32 %v732, %v750
    %v767 = vmax.f32 %v734, %v751
    %v768 = vpack.c.bf16 %v754, %v752
    %v769 = vpack.c.bf16 %v755, %v753
    %v770 = vpack.c.bf16 %v758, %v756
    %v771 = vpack.c.bf16 %v759, %v757
    %v772 = vpack.c.bf16 %v762, %v760
    %v773 = vpack.c.bf16 %v763, %v761
    %v774 = vpack.c.bf16 %v766, %v764
    %v775 = vpack.c.bf16 %v767, %v765
    %v776 = vld [vmem:[#allocation9] sm:$0xff]
    %v777 = vld [vmem:[#allocation9 + $0x8] sm:$0xff]
    %v778 = vld [vmem:[#allocation9 + $0x10] sm:$0xff]
    %v779 = vld [vmem:[#allocation9 + $0x18] sm:$0xff]
    %v780 = vld [vmem:[#allocation9 + $0x20] sm:$0xff]
    %v781 = vld [vmem:[#allocation9 + $0x28] sm:$0xff]
    %v782 = vld [vmem:[#allocation9 + $0x30] sm:$0xff]
    %v783 = vld [vmem:[#allocation9 + $0x38] sm:$0xff]
    %v784 = vld [vmem:[#allocation9 + $0x40] sm:$0xff]
    %v785 = vld [vmem:[#allocation9 + $0x48] sm:$0xff]
    %v786 = vld [vmem:[#allocation9 + $0x50] sm:$0xff]
    %v787 = vld [vmem:[#allocation9 + $0x58] sm:$0xff]
    %v788 = vld [vmem:[#allocation9 + $0x60] sm:$0xff]
    %v789 = vld [vmem:[#allocation9 + $0x68] sm:$0xff]
    %v790 = vld [vmem:[#allocation9 + $0x70] sm:$0xff]
    %v791 = vld [vmem:[#allocation9 + $0x78] sm:$0xff]
    %v792 = vld [vmem:[#allocation9 + $0x80] sm:$0xff]
    %v793 = vld [vmem:[#allocation9 + $0x88] sm:$0xff]
    %v794 = vld [vmem:[#allocation9 + $0x90] sm:$0xff]
    %v795 = vld [vmem:[#allocation9 + $0x98] sm:$0xff]
    %v796 = vld [vmem:[#allocation9 + $0xa0] sm:$0xff]
    %v797 = vld [vmem:[#allocation9 + $0xa8] sm:$0xff]
    %v798 = vld [vmem:[#allocation9 + $0xb0] sm:$0xff]
    %v799 = vld [vmem:[#allocation9 + $0xb8] sm:$0xff]
    %v800 = vld [vmem:[#allocation9 + $0xc0] sm:$0xff]
    %v801 = vld [vmem:[#allocation9 + $0xc8] sm:$0xff]
    %v802 = vld [vmem:[#allocation9 + $0xd0] sm:$0xff]
    %v803 = vld [vmem:[#allocation9 + $0xd8] sm:$0xff]
    %v804 = vld [vmem:[#allocation9 + $0xe0] sm:$0xff]
    %v805 = vld [vmem:[#allocation9 + $0xe8] sm:$0xff]
    %v806 = vld [vmem:[#allocation9 + $0xf0] sm:$0xff]
    %v807 = vld [vmem:[#allocation9 + $0xf8] sm:$0xff]
    %v808 = vld [vmem:[%s5] sm:$0x3]
    %v810 = vlaneseq
    %v811 = vshrl.u32 %v810, 7
    %v812 = vsub.s32 0, %v811
    %v813 = vrot.slane %v808, %v812
    %v814 = vlaneseq
    %v815 = vshrl.u32 %v814, 7
    %v816 = vsub.s32 1, %v815
    %v817 = vrot.slane %v808, %v816
    %v852 = vunpack.c.l.b16 %v776
    %v853 = vunpack.c.h.b16 %v776
    %v854 = vunpack.c.l.b16 %v777
    %v855 = vunpack.c.h.b16 %v777
    %v856 = vunpack.c.l.b16 %v778
    %v857 = vunpack.c.h.b16 %v778
    %v858 = vunpack.c.l.b16 %v779
    %v859 = vunpack.c.h.b16 %v779
    %v860 = vunpack.c.l.b16 %v780
    %v861 = vunpack.c.h.b16 %v780
    %v862 = vunpack.c.l.b16 %v781
    %v863 = vunpack.c.h.b16 %v781
    %v864 = vunpack.c.l.b16 %v782
    %v865 = vunpack.c.h.b16 %v782
    %v866 = vunpack.c.l.b16 %v783
    %v867 = vunpack.c.h.b16 %v783
    %v868 = vunpack.c.l.b16 %v784
    %v869 = vunpack.c.h.b16 %v784
    %v870 = vunpack.c.l.b16 %v785
    %v871 = vunpack.c.h.b16 %v785
    %v872 = vunpack.c.l.b16 %v786
    %v873 = vunpack.c.h.b16 %v786
    %v874 = vunpack.c.l.b16 %v787
    %v875 = vunpack.c.h.b16 %v787
    %v876 = vunpack.c.l.b16 %v788
    %v877 = vunpack.c.h.b16 %v788
    %v878 = vunpack.c.l.b16 %v789
    %v879 = vunpack.c.h.b16 %v789
    %v880 = vunpack.c.l.b16 %v790
    %v881 = vunpack.c.h.b16 %v790
    %v882 = vunpack.c.l.b16 %v791
    %v883 = vunpack.c.h.b16 %v791
    %v884 = vunpack.c.l.b16 %v792
    %v885 = vunpack.c.h.b16 %v792
    %v886 = vunpack.c.l.b16 %v793
    %v887 = vunpack.c.h.b16 %v793
    %v888 = vunpack.c.l.b16 %v794
    %v889 = vunpack.c.h.b16 %v794
    %v890 = vunpack.c.l.b16 %v795
    %v891 = vunpack.c.h.b16 %v795
    %v892 = vunpack.c.l.b16 %v796
    %v893 = vunpack.c.h.b16 %v796
    %v894 = vunpack.c.l.b16 %v797
    %v895 = vunpack.c.h.b16 %v797
    %v896 = vunpack.c.l.b16 %v798
    %v897 = vunpack.c.h.b16 %v798
    %v898 = vunpack.c.l.b16 %v799
    %v899 = vunpack.c.h.b16 %v799
    %v900 = vunpack.c.l.b16 %v800
    %v901 = vunpack.c.h.b16 %v800
    %v902 = vunpack.c.l.b16 %v801
    %v903 = vunpack.c.h.b16 %v801
    %v904 = vunpack.c.l.b16 %v802
    %v905 = vunpack.c.h.b16 %v802
    %v906 = vunpack.c.l.b16 %v803
    %v907 = vunpack.c.h.b16 %v803
    %v908 = vunpack.c.l.b16 %v804
    %v909 = vunpack.c.h.b16 %v804
    %v910 = vunpack.c.l.b16 %v805
    %v911 = vunpack.c.h.b16 %v805
    %v912 = vunpack.c.l.b16 %v806
    %v913 = vunpack.c.h.b16 %v806
    %v914 = vunpack.c.l.b16 %v807
    %v915 = vunpack.c.h.b16 %v807
    %v916 = vpack.c.b16 %v854, %v852
    %v917 = vpack.c.b16 %v855, %v853
    %v918 = vpack.c.b16 %v858, %v856
    %v919 = vpack.c.b16 %v859, %v857
    %v920 = vpack.c.b16 %v862, %v860
    %v921 = vpack.c.b16 %v863, %v861
    %v922 = vpack.c.b16 %v866, %v864
    %v923 = vpack.c.b16 %v867, %v865
    %v924 = vpack.c.b16 %v870, %v868
    %v925 = vpack.c.b16 %v871, %v869
    %v926 = vpack.c.b16 %v874, %v872
    %v927 = vpack.c.b16 %v875, %v873
    %v928 = vpack.c.b16 %v878, %v876
    %v929 = vpack.c.b16 %v879, %v877
    %v930 = vpack.c.b16 %v882, %v880
    %v931 = vpack.c.b16 %v883, %v881
    %v932 = vpack.c.b16 %v886, %v884
    %v933 = vpack.c.b16 %v887, %v885
    %v934 = vpack.c.b16 %v890, %v888
    %v935 = vpack.c.b16 %v891, %v889
    %v936 = vpack.c.b16 %v894, %v892
    %v937 = vpack.c.b16 %v895, %v893
    %v938 = vpack.c.b16 %v898, %v896
    %v939 = vpack.c.b16 %v899, %v897
    %v940 = vpack.c.b16 %v902, %v900
    %v941 = vpack.c.b16 %v903, %v901
    %v942 = vpack.c.b16 %v906, %v904
    %v943 = vpack.c.b16 %v907, %v905
    %v944 = vpack.c.b16 %v910, %v908
    %v945 = vpack.c.b16 %v911, %v909
    %v946 = vpack.c.b16 %v914, %v912
    %v947 = vpack.c.b16 %v915, %v913
    %980 = vmatprep.subr.bf16.mxu0 %v917
    %981 = vmatpush1.bf16.msra.mxu0 %v916
    %982 = vmatprep.subr.bf16.mxu0 %v919
    %983 = vmatpush1.bf16.msra.mxu0 %v918
    %984 = vmatprep.subr.bf16.mxu0 %v921
    %985 = vmatpush1.bf16.msra.mxu0 %v920
    %986 = vmatprep.subr.bf16.mxu0 %v923
    %987 = vmatpush1.bf16.msra.mxu0 %v922
    %988 = vmatprep.subr.bf16.mxu0 %v925
    %989 = vmatpush1.bf16.msra.mxu0 %v924
    %990 = vmatprep.subr.bf16.mxu0 %v927
    %991 = vmatpush1.bf16.msra.mxu0 %v926
    %992 = vmatprep.subr.bf16.mxu0 %v929
    %993 = vmatpush1.bf16.msra.mxu0 %v928
    %994 = vmatprep.subr.bf16.mxu0 %v931
    %995 = vmatpush1.bf16.msra.mxu0 %v930
    %996 = vmatprep.subr.bf16.mxu0 %v933
    %997 = vmatpush1.bf16.msra.mxu0 %v932
    %998 = vmatprep.subr.bf16.mxu0 %v935
    %999 = vmatpush1.bf16.msra.mxu0 %v934
    %1000 = vmatprep.subr.bf16.mxu0 %v937
    %1001 = vmatpush1.bf16.msra.mxu0 %v936
    %1002 = vmatprep.subr.bf16.mxu0 %v939
    %1003 = vmatpush1.bf16.msra.mxu0 %v938
    %1004 = vmatprep.subr.bf16.mxu0 %v941
    %1005 = vmatpush1.bf16.msra.mxu0 %v940
    %1006 = vmatprep.subr.bf16.mxu0 %v943
    %1007 = vmatpush1.bf16.msra.mxu0 %v942
    %1008 = vmatprep.subr.bf16.mxu0 %v945
    %1009 = vmatpush1.bf16.msra.mxu0 %v944
    %1010 = vmatprep.subr.bf16.mxu0 %v947
    %1011 = vmatpush1.bf16.msra.mxu0 %v946
    %1012 = vmatprep.mubr.bf16.mxu0 %v769
    %1013 = vmatmul.mubr.bf16.gmra.mrb[0].mxu0 %v768
    %v1014 = vpop.f32.mrb[0].mxu0
    %v1015 = vadd.f32 %v813, %v1014
    %v1016 = vpop.f32.mrb[0].mxu0
    %v1017 = vadd.f32 %v817, %v1016
    %v1018 = vpop.f32.mrb[0].mxu0
    %v1019 = vadd.f32 %v813, %v1018
    %v1020 = vpop.f32.mrb[0].mxu0
    %v1021 = vadd.f32 %v817, %v1020
    %1022 = vmatprep.mubr.bf16.mxu0 %v771
    %1023 = vmatmul.mubr.bf16.gmra.mrb[0].mxu0 %v770
    %v1024 = vpop.f32.mrb[0].mxu0
    %v1025 = vadd.f32 %v813, %v1024
    %v1026 = vpop.f32.mrb[0].mxu0
    %v1027 = vadd.f32 %v817, %v1026
    %v1028 = vpop.f32.mrb[0].mxu0
    %v1029 = vadd.f32 %v813, %v1028
    %v1030 = vpop.f32.mrb[0].mxu0
    %v1031 = vadd.f32 %v817, %v1030
    %1032 = vmatprep.mubr.bf16.mxu0 %v773
    %1033 = vmatmul.mubr.bf16.gmra.mrb[0].mxu0 %v772
    %v1034 = vpop.f32.mrb[0].mxu0
    %v1035 = vadd.f32 %v813, %v1034
    %v1036 = vpop.f32.mrb[0].mxu0
    %v1037 = vadd.f32 %v817, %v1036
    %v1038 = vpop.f32.mrb[0].mxu0
    %v1039 = vadd.f32 %v813, %v1038
    %v1040 = vpop.f32.mrb[0].mxu0
    %v1041 = vadd.f32 %v817, %v1040
    %1042 = vmatprep.mubr.bf16.mxu0 %v775
    %1043 = vmatmul.mubr.bf16.gmra.mrb[0].mxu0 %v774
    %v1044 = vpop.f32.mrb[0].mxu0
    %v1045 = vadd.f32 %v813, %v1044
    %v1046 = vpop.f32.mrb[0].mxu0
    %v1047 = vadd.f32 %v817, %v1046
    %v1048 = vpop.f32.mrb[0].mxu0
    %v1049 = vadd.f32 %v813, %v1048
    %v1050 = vpop.f32.mrb[0].mxu0
    %v1051 = vadd.f32 %v817, %v1050
    %1052 = vdwg.mxu0
    %v1053 = vadd.f32 %v1015, %v435
    %v1054 = vadd.f32 %v1017, %v436
    %v1055 = vadd.f32 %v1019, %v437
    %v1056 = vadd.f32 %v1021, %v438
    %v1057 = vadd.f32 %v1025, %v439
    %v1058 = vadd.f32 %v1027, %v440
    %v1059 = vadd.f32 %v1029, %v441
    %v1060 = vadd.f32 %v1031, %v442
    %v1061 = vadd.f32 %v1035, %v443
    %v1062 = vadd.f32 %v1037, %v444
    %v1063 = vadd.f32 %v1039, %v445
    %v1064 = vadd.f32 %v1041, %v446
    %v1065 = vadd.f32 %v1045, %v447
    %v1066 = vadd.f32 %v1047, %v448
    %v1067 = vadd.f32 %v1049, %v449
    %v1068 = vadd.f32 %v1051, %v450
    %v1069 = vpack.c.bf16 %v1055, %v1053
    %v1070 = vpack.c.bf16 %v1056, %v1054
    %v1071 = vpack.c.bf16 %v1059, %v1057
    %v1072 = vpack.c.bf16 %v1060, %v1058
    %v1073 = vpack.c.bf16 %v1063, %v1061
    %v1074 = vpack.c.bf16 %v1064, %v1062
    %v1075 = vpack.c.bf16 %v1067, %v1065
    %v1076 = vpack.c.bf16 %v1068, %v1066
    %v1077 = vld [vmem:[#allocation11] sm:$0xf]
    %v1078 = vld [vmem:[#allocation11 + $0x4] sm:$0xf]
    %v1079 = vld [vmem:[#allocation11 + $0x8] sm:$0xf]
    %v1080 = vld [vmem:[#allocation11 + $0xc] sm:$0xf]
    %v1081 = vld [vmem:[#allocation11 + $0x10] sm:$0xf]
    %v1082 = vld [vmem:[#allocation11 + $0x14] sm:$0xf]
    %v1083 = vld [vmem:[#allocation11 + $0x18] sm:$0xf]
    %v1084 = vld [vmem:[#allocation11 + $0x1c] sm:$0xf]
    %v1085 = vld [vmem:[#allocation11 + $0x20] sm:$0xf]
    %v1086 = vld [vmem:[#allocation11 + $0x24] sm:$0xf]
    %v1087 = vld [vmem:[#allocation11 + $0x28] sm:$0xf]
    %v1088 = vld [vmem:[#allocation11 + $0x2c] sm:$0xf]
    %v1089 = vld [vmem:[#allocation11 + $0x30] sm:$0xf]
    %v1090 = vld [vmem:[#allocation11 + $0x34] sm:$0xf]
    %v1091 = vld [vmem:[#allocation11 + $0x38] sm:$0xf]
    %v1092 = vld [vmem:[#allocation11 + $0x3c] sm:$0xf]
    %v1093 = vld [vmem:[#allocation11 + $0x40] sm:$0xf]
    %v1094 = vld [vmem:[#allocation11 + $0x44] sm:$0xf]
    %v1095 = vld [vmem:[#allocation11 + $0x48] sm:$0xf]
    %v1096 = vld [vmem:[#allocation11 + $0x4c] sm:$0xf]
    %v1097 = vld [vmem:[#allocation11 + $0x50] sm:$0xf]
    %v1098 = vld [vmem:[#allocation11 + $0x54] sm:$0xf]
    %v1099 = vld [vmem:[#allocation11 + $0x58] sm:$0xf]
    %v1100 = vld [vmem:[#allocation11 + $0x5c] sm:$0xf]
    %v1101 = vld [vmem:[#allocation11 + $0x60] sm:$0xf]
    %v1102 = vld [vmem:[#allocation11 + $0x64] sm:$0xf]
    %v1103 = vld [vmem:[#allocation11 + $0x68] sm:$0xf]
    %v1104 = vld [vmem:[#allocation11 + $0x6c] sm:$0xf]
    %v1105 = vld [vmem:[#allocation11 + $0x70] sm:$0xf]
    %v1106 = vld [vmem:[#allocation11 + $0x74] sm:$0xf]
    %v1107 = vld [vmem:[#allocation11 + $0x78] sm:$0xf]
    %v1108 = vld [vmem:[#allocation11 + $0x7c] sm:$0xf]
    %v1109 = vld [vmem:[%s7] sm:$0x1]
    %v1111 = vlaneseq
    %v1112 = vshrl.u32 %v1111, 7
    %v1113 = vsub.s32 0, %v1112
    %v1114 = vrot.slane %v1109, %v1113
    %v1148 = vunpack.c.l.b16 %v1077
    %v1149 = vunpack.c.l.b16 %v1078
    %v1150 = vunpack.c.l.b16 %v1079
    %v1151 = vunpack.c.l.b16 %v1080
    %v1152 = vunpack.c.l.b16 %v1081
    %v1153 = vunpack.c.l.b16 %v1082
    %v1154 = vunpack.c.l.b16 %v1083
    %v1155 = vunpack.c.l.b16 %v1084
    %v1156 = vunpack.c.l.b16 %v1085
    %v1157 = vunpack.c.l.b16 %v1086
    %v1158 = vunpack.c.l.b16 %v1087
    %v1159 = vunpack.c.l.b16 %v1088
    %v1160 = vunpack.c.l.b16 %v1089
    %v1161 = vunpack.c.l.b16 %v1090
    %v1162 = vunpack.c.l.b16 %v1091
    %v1163 = vunpack.c.l.b16 %v1092
    %v1164 = vunpack.c.l.b16 %v1093
    %v1165 = vunpack.c.l.b16 %v1094
    %v1166 = vunpack.c.l.b16 %v1095
    %v1167 = vunpack.c.l.b16 %v1096
    %v1168 = vunpack.c.l.b16 %v1097
    %v1169 = vunpack.c.l.b16 %v1098
    %v1170 = vunpack.c.l.b16 %v1099
    %v1171 = vunpack.c.l.b16 %v1100
    %v1172 = vunpack.c.l.b16 %v1101
    %v1173 = vunpack.c.l.b16 %v1102
    %v1174 = vunpack.c.l.b16 %v1103
    %v1175 = vunpack.c.l.b16 %v1104
    %v1176 = vunpack.c.l.b16 %v1105
    %v1177 = vunpack.c.l.b16 %v1106
    %v1178 = vunpack.c.l.b16 %v1107
    %v1179 = vunpack.c.l.b16 %v1108
    %v1180 = vpack.c.b16 %v1149, %v1148
    %v1181 = vpack.c.b16 %v1151, %v1150
    %v1182 = vpack.c.b16 %v1153, %v1152
    %v1183 = vpack.c.b16 %v1155, %v1154
    %v1184 = vpack.c.b16 %v1157, %v1156
    %v1185 = vpack.c.b16 %v1159, %v1158
    %v1186 = vpack.c.b16 %v1161, %v1160
    %v1187 = vpack.c.b16 %v1163, %v1162
    %v1188 = vpack.c.b16 %v1165, %v1164
    %v1189 = vpack.c.b16 %v1167, %v1166
    %v1190 = vpack.c.b16 %v1169, %v1168
    %v1191 = vpack.c.b16 %v1171, %v1170
    %v1192 = vpack.c.b16 %v1173, %v1172
    %v1193 = vpack.c.b16 %v1175, %v1174
    %v1194 = vpack.c.b16 %v1177, %v1176
    %v1195 = vpack.c.b16 %v1179, %v1178
    %1212 = vmatprep.subr.bf16.mxu0 0
    %1213 = vmatpush1.bf16.msra.mxu0 %v1180
    %1214 = vmatprep.subr.bf16.mxu0 0
    %1215 = vmatpush1.bf16.msra.mxu0 %v1181
    %1216 = vmatprep.subr.bf16.mxu0 0
    %1217 = vmatpush1.bf16.msra.mxu0 %v1182
    %1218 = vmatprep.subr.bf16.mxu0 0
    %1219 = vmatpush1.bf16.msra.mxu0 %v1183
    %1220 = vmatprep.subr.bf16.mxu0 0
    %1221 = vmatpush1.bf16.msra.mxu0 %v1184
    %1222 = vmatprep.subr.bf16.mxu0 0
    %1223 = vmatpush1.bf16.msra.mxu0 %v1185
    %1224 = vmatprep.subr.bf16.mxu0 0
    %1225 = vmatpush1.bf16.msra.mxu0 %v1186
    %1226 = vmatprep.subr.bf16.mxu0 0
    %1227 = vmatpush1.bf16.msra.mxu0 %v1187
    %1228 = vmatprep.subr.bf16.mxu0 0
    %1229 = vmatpush1.bf16.msra.mxu0 %v1188
    %1230 = vmatprep.subr.bf16.mxu0 0
    %1231 = vmatpush1.bf16.msra.mxu0 %v1189
    %1232 = vmatprep.subr.bf16.mxu0 0
    %1233 = vmatpush1.bf16.msra.mxu0 %v1190
    %1234 = vmatprep.subr.bf16.mxu0 0
    %1235 = vmatpush1.bf16.msra.mxu0 %v1191
    %1236 = vmatprep.subr.bf16.mxu0 0
    %1237 = vmatpush1.bf16.msra.mxu0 %v1192
    %1238 = vmatprep.subr.bf16.mxu0 0
    %1239 = vmatpush1.bf16.msra.mxu0 %v1193
    %1240 = vmatprep.subr.bf16.mxu0 0
    %1241 = vmatpush1.bf16.msra.mxu0 %v1194
    %1242 = vmatprep.subr.bf16.mxu0 0
    %1243 = vmatpush1.bf16.msra.mxu0 %v1195
    %1244 = vmatprep.mubr.bf16.mxu0 %v1070
    %1245 = vmatmul.mubr.bf16.gmra.mrb[0].mxu0 %v1069
    %v1246 = vpop.f32.mrb[0].mxu0
    %v1247 = vadd.f32 %v1114, %v1246
    %v1248 = vpop.f32.mrb[0].mxu0
    %v1249 = vpop.f32.mrb[0].mxu0
    %v1250 = vadd.f32 %v1114, %v1249
    %v1251 = vpop.f32.mrb[0].mxu0
    %1252 = vmatprep.mubr.bf16.mxu0 %v1072
    %1253 = vmatmul.mubr.bf16.gmra.mrb[0].mxu0 %v1071
    %v1254 = vpop.f32.mrb[0].mxu0
    %v1255 = vadd.f32 %v1114, %v1254
    %v1256 = vpop.f32.mrb[0].mxu0
    %v1257 = vpop.f32.mrb[0].mxu0
    %v1258 = vadd.f32 %v1114, %v1257
    %v1259 = vpop.f32.mrb[0].mxu0
    %1260 = vmatprep.mubr.bf16.mxu0 %v1074
    %1261 = vmatmul.mubr.bf16.gmra.mrb[0].mxu0 %v1073
    %v1262 = vpop.f32.mrb[0].mxu0
    %v1263 = vadd.f32 %v1114, %v1262
    %v1264 = vpop.f32.mrb[0].mxu0
    %v1265 = vpop.f32.mrb[0].mxu0
    %v1266 = vadd.f32 %v1114, %v1265
    %v1267 = vpop.f32.mrb[0].mxu0
    %1268 = vmatprep.mubr.bf16.mxu0 %v1076
    %1269 = vmatmul.mubr.bf16.gmra.mrb[0].mxu0 %v1075
    %v1270 = vpop.f32.mrb[0].mxu0
    %v1271 = vadd.f32 %v1114, %v1270
    %v1272 = vpop.f32.mrb[0].mxu0
    %v1273 = vpop.f32.mrb[0].mxu0
    %v1274 = vadd.f32 %v1114, %v1273
    %v1275 = vpop.f32.mrb[0].mxu0
    %1276 = vdwg.mxu0
    %v1277 = vmul.f32 %v1247, 0.01
    %v1278 = vmul.f32 %v1250, 0.01
    %v1279 = vmul.f32 %v1255, 0.01
    %v1280 = vmul.f32 %v1258, 0.01
    %v1281 = vmul.f32 %v1263, 0.01
    %v1282 = vmul.f32 %v1266, 0.01
    %v1283 = vmul.f32 %v1271, 0.01
    %v1284 = vmul.f32 %v1274, 0.01
    %v1285 = vmax.f32 %v1247, %v1277
    %v1286 = vmax.f32 %v1250, %v1278
    %v1287 = vmax.f32 %v1255, %v1279
    %v1288 = vmax.f32 %v1258, %v1280
    %v1289 = vmax.f32 %v1263, %v1281
    %v1290 = vmax.f32 %v1266, %v1282
    %v1291 = vmax.f32 %v1271, %v1283
    %v1292 = vmax.f32 %v1274, %v1284
    %v1293 = vld [vmem:[%s8] sm:$0x1]
    %v1295 = vlaneseq
    %v1296 = vshrl.u32 %v1295, 7
    %v1297 = vsub.s32 0, %v1296
    %v1298 = vrot.slane %v1293, %v1297
    %v1300 = vmul.f32 %v1285, %v1298
    %v1301 = vmul.f32 %v1286, %v1298
    %v1302 = vmul.f32 %v1287, %v1298
    %v1303 = vmul.f32 %v1288, %v1298
    %v1304 = vmul.f32 %v1289, %v1298
    %v1305 = vmul.f32 %v1290, %v1298
    %v1306 = vmul.f32 %v1291, %v1298
    %v1307 = vmul.f32 %v1292, %v1298
    %1308 = vadd.xlane.f32.xlu0 %v1300
    %v1309 = vpop.xlane.xlu0 %1308
    %1310 = vadd.xlane.f32.xlu0 %v1301
    %v1311 = vpop.xlane.xlu0 %1310
    %1312 = vadd.xlane.f32.xlu0 %v1302
    %v1313 = vpop.xlane.xlu0 %1312
    %1314 = vadd.xlane.f32.xlu0 %v1303
    %v1315 = vpop.xlane.xlu0 %1314
    %1316 = vadd.xlane.f32.xlu0 %v1304
    %v1317 = vpop.xlane.xlu0 %1316
    %1318 = vadd.xlane.f32.xlu0 %v1305
    %v1319 = vpop.xlane.xlu0 %1318
    %1320 = vadd.xlane.f32.xlu0 %v1306
    %v1321 = vpop.xlane.xlu0 %1320
    %1322 = vadd.xlane.f32.xlu0 %v1307
    %v1323 = vpop.xlane.xlu0 %1322
    %s1324 = sld [smem:[#allocation2]]
    %v1325 = vstv %s1324
    %v1326 = vadd.f32 %v1309, %v1325
    %v1327 = vadd.f32 %v1311, %v1325
    %v1328 = vadd.f32 %v1313, %v1325
    %v1329 = vadd.f32 %v1315, %v1325
    %v1330 = vadd.f32 %v1317, %v1325
    %v1331 = vadd.f32 %v1319, %v1325
    %v1332 = vadd.f32 %v1321, %v1325
    %v1333 = vadd.f32 %v1323, %v1325
    %v1342 = vlaneseq
    %v1343 = vand.u32 %v1342, 127
    %v1344 = vlaneseq
    %v1345 = vshrl.u32 %v1344, 7
    %v1346 = vsub.s32 %v1343, %v1345
    %v1347 = vrot.slane %v1326, %v1346
    %v1348 = vadd.s32 %v1343, 4294967288
    %v1349 = vlaneseq
    %v1350 = vshrl.u32 %v1349, 7
    %v1351 = vsub.s32 %v1348, %v1350
    %v1352 = vrot.slane %v1327, %v1351
    %vm1353 = vcmask 130112
    %v1354 = vsel %vm1353, %v1352, %v1347
    %v1355 = vadd.s32 %v1343, 4294967280
    %v1356 = vlaneseq
    %v1357 = vshrl.u32 %v1356, 7
    %v1358 = vsub.s32 %v1355, %v1357
    %v1359 = vrot.slane %v1328, %v1358
    %vm1360 = vcmask 195712
    %v1361 = vsel %vm1360, %v1359, %v1354
    %v1362 = vadd.s32 %v1343, 4294967272
    %v1363 = vlaneseq
    %v1364 = vshrl.u32 %v1363, 7
    %v1365 = vsub.s32 %v1362, %v1364
    %v1366 = vrot.slane %v1329, %v1365
    %vm1367 = vcmask 261312
    %v1368 = vsel %vm1367, %v1366, %v1361
    %v1369 = vadd.s32 %v1343, 4294967264
    %v1370 = vlaneseq
    %v1371 = vshrl.u32 %v1370, 7
    %v1372 = vsub.s32 %v1369, %v1371
    %v1373 = vrot.slane %v1330, %v1372
    %vm1374 = vcmask 326912
    %v1375 = vsel %vm1374, %v1373, %v1368
    %v1376 = vadd.s32 %v1343, 4294967256
    %v1377 = vlaneseq
    %v1378 = vshrl.u32 %v1377, 7
    %v1379 = vsub.s32 %v1376, %v1378
    %v1380 = vrot.slane %v1331, %v1379
    %vm1381 = vcmask 392512
    %v1382 = vsel %vm1381, %v1380, %v1375
    %v1383 = vadd.s32 %v1343, 4294967248
    %v1384 = vlaneseq
    %v1385 = vshrl.u32 %v1384, 7
    %v1386 = vsub.s32 %v1383, %v1385
    %v1387 = vrot.slane %v1332, %v1386
    %vm1388 = vcmask 458112
    %v1389 = vsel %vm1388, %v1387, %v1382
    %v1390 = vadd.s32 %v1343, 4294967240
    %v1391 = vlaneseq
    %v1392 = vshrl.u32 %v1391, 7
    %v1393 = vsub.s32 %v1390, %v1392
    %v1394 = vrot.slane %v1333, %v1393
    %vm1395 = vcmask 523712
    %v1396 = vsel %vm1395, %v1394, %v1389
    %vm1398 = vcmask 516096
    %1399 = vst.msk [vmem:[#allocation12] sm:$0x1] %vm1398, %v1396
    // Predicated region
    $region62: #{tpu_custom_call.1} parent=1 // pred_check
      _
    $region63: #{tpu_custom_call.1} parent=1 // pred_check_branch
      %1401 = sbr.rel (0) target = $region65
    $region64: #{tpu_custom_call.1} parent=1 // pred_region
      %s1403 = ssub.s32 16, 16
      %1404 = vsyncadd [#allocation5], %s1403
      %s1406 = sshll.u32 [#allocation12], 4
      %s1407 = int_to_ptr.vmem [resolvable:$true] %s1406
      %1409 = dma.vmem_to_hbm [thread:$0]  %s1407, 16, %s10, [#allocation5]
    $region65: #{tpu_custom_call.1} parent=1 // pred_fallthru
      _
    // Predicated region
    $region66: #{tpu_custom_call.1} parent=1 // pred_check
      _
    $region67: #{tpu_custom_call.1} parent=1 // pred_check_branch
      %1411 = sbr.rel (0) target = $region69
    $region68: #{tpu_custom_call.1} parent=1 // pred_region
      %1412 = dma.done [#allocation5], 16
    $region69: #{tpu_custom_call.1} parent=1 // pred_fallthru
      _
    %1413 = vsyncpa [#allocation4], 1
    %1414 = vsyncpa [#allocation7], 1
    %1415 = vsyncpa [#allocation10], 1
    %1416 = vsyncpa [#allocation5], 1

</llo_original>
